<compile_context>
chip_gen: v5e
topology: v5e:2x2
jax: 0.10.0
libtpu: 0.0.40
codegen_flags: <defaults>
</compile_context>

<pallas_src>
import math

import jax
import jax.numpy as jnp
import numpy as np
from jax.experimental import pallas as pl
from jax.experimental.pallas import tpu as pltpu


_SQRT_2_OVER_PI = 0.7978845608028654


def _gelu_tanh(x):
    # tanh-approximate GELU (tanh lowers to the otherwise-idle EUP slot).
    # TODO(synk): PyTorch nn.GELU() default is the exact erf form; erf has no
    # guaranteed Mosaic lowering, so the tanh approximation (<~1e-3 abs diff) is used.
    return 0.5 * x * (1.0 + jnp.tanh(_SQRT_2_OVER_PI * (x + 0.044715 * (x * x * x))))


def _round_up(x, m):
    return ((x + m - 1) // m) * m


def _sublane_rows(dtype):
    # Rows per fully packed sublane group: 8 for 4-byte, 16 for 2-byte, 32 for 1-byte.
    return {4: 8, 2: 16, 1: 32}.get(jnp.dtype(dtype).itemsize, 8)


# --------------------------------------------------------------------------
# Pallas kernel: one block of TM rows per grid step
# --------------------------------------------------------------------------
def _mlp_kernel(x_ref, w1_ref, b1_ref, w2_ref, b2_ref, o_ref):
    x = x_ref[...]                                             # (TM, Cin_p)

    # fc1 : MXU matmul, f32 accumulate; bias is already (1, H_p) f32.
    h = jnp.dot(x, w1_ref[...], preferred_element_type=jnp.float32)
    h = h + b1_ref[...]                                        # (TM, H_p) f32

    # activation in f32 (VPU + EUP tanh)
    h = _gelu_tanh(h)
    # TODO(synk): nn.Dropout is identity in eval / drop=0.0; training-mode dropout
    # (RNG masking) is not implemented.

    # fc2 : MXU matmul, f32 accumulate; bias is already (1, Cout_p) f32.
    h = h.astype(w2_ref.dtype)
    y = jnp.dot(h, w2_ref[...], preferred_element_type=jnp.float32)
    y = y + b2_ref[...]                                        # (TM, Cout_p) f32

    o_ref[...] = y.astype(o_ref.dtype)


# --------------------------------------------------------------------------
# Wrapper
# --------------------------------------------------------------------------
def mlp_forward(x, w1, b1, w2, b2, *, block_rows=512, compute_dtype=None):
    """x: (..., Cin); w1: (Cin, H); b1: (H,); w2: (H, Cout); b2: (Cout,).

    Weights are stored (in, out), i.e. the transpose of PyTorch nn.Linear's
    (out, in) layout, so the in-kernel op is x @ W.

    compute_dtype: optional dtype (e.g. jnp.bfloat16) to cast matmul operands to
    for the bf16 MXU fast path on v6e/v7x.  Accumulation stays f32 either way.
    """
    *lead, c_in = x.shape
    hidden = w1.shape[1]
    c_out = w2.shape[1]
    assert w1.shape == (c_in, hidden), "w1 must be (in_features, hidden_features)"
    assert b1.shape == (hidden,)
    assert w2.shape == (hidden, c_out), "w2 must be (hidden_features, out_features)"
    assert b2.shape == (c_out,)

    out_dtype = x.dtype
    op_dtype = jnp.dtype(compute_dtype) if compute_dtype is not None else jnp.dtype(x.dtype)

    # ---- lane-dense channel padding (zeros; safe through GELU and the 2nd matmul)
    c_in_p = _round_up(c_in, 128)
    hidden_p = _round_up(hidden, 128)
    c_out_p = _round_up(c_out, 128)

    x2 = x.reshape(-1, c_in)
    m = x2.shape[0]

    # ---- row tiling: sublane-packed tm, >=2 grid steps when M permits
    sub = _sublane_rows(op_dtype)
    block_rows = max(_round_up(block_rows, sub), sub)
    tm = min(block_rows, max(sub, _round_up(-(-m // 2), sub)))
    m_pad = _round_up(m, tm)

    x2 = jnp.pad(x2, ((0, m_pad - m), (0, c_in_p - c_in))).astype(op_dtype)
    w1p = jnp.pad(w1, ((0, c_in_p - c_in), (0, hidden_p - hidden))).astype(op_dtype)
    w2p = jnp.pad(w2, ((0, hidden_p - hidden), (0, c_out_p - c_out))).astype(op_dtype)
    # biases: 2-D, f32, zero-padded (padded lanes stay exactly 0)
    b1p = jnp.pad(b1, (0, hidden_p - hidden)).astype(jnp.float32).reshape(1, hidden_p)
    b2p = jnp.pad(b2, (0, c_out_p - c_out)).astype(jnp.float32).reshape(1, c_out_p)

    # ---- VMEM budget (double-buffered I/O blocks, single-buffered weights,
    #      f32 (TM, H_p) intermediate working set) + headroom
    in_b = jnp.dtype(op_dtype).itemsize
    out_b = jnp.dtype(out_dtype).itemsize
    vmem_need = (
        2 * tm * c_in_p * in_b
        + 2 * tm * c_out_p * out_b
        + (c_in_p * hidden_p + hidden_p * c_out_p) * in_b
        + (hidden_p + c_out_p) * 4
        + 2 * tm * hidden_p * 4
    )
    vmem_limit_bytes = int(min(max(vmem_need * 1.5, 4 * 1024 * 1024), 64 * 1024 * 1024))

    cost = pl.CostEstimate(
        flops=2 * m_pad * (c_in_p * hidden_p + hidden_p * c_out_p),
        transcendentals=m_pad * hidden_p,
        bytes_accessed=(
            m_pad * c_in_p * in_b
            + m_pad * c_out_p * out_b
            + (c_in_p * hidden_p + hidden_p * c_out_p) * in_b
            + (hidden_p + c_out_p) * 4
        ),
    )

    resident = pl.Buffered(1)  # constant index_map -> no point double-buffering

    out2 = pl.pallas_call(
        _mlp_kernel,
        out_shape=jax.ShapeDtypeStruct((m_pad, c_out_p), out_dtype),
        grid=(m_pad // tm,),
        in_specs=[
            pl.BlockSpec((tm, c_in_p), lambda i: (i, 0)),                 # x row block
            pl.BlockSpec((c_in_p, hidden_p), lambda i: (0, 0),
                         pipeline_mode=resident),                         # W1 (resident)
            pl.BlockSpec((1, hidden_p), lambda i: (0, 0),
                         pipeline_mode=resident),                         # b1 (resident)
            pl.BlockSpec((hidden_p, c_out_p), lambda i: (0, 0),
                         pipeline_mode=resident),                         # W2 (resident)
            pl.BlockSpec((1, c_out_p), lambda i: (0, 0),
                         pipeline_mode=resident),                         # b2 (resident)
        ],
        out_specs=pl.BlockSpec((tm, c_out_p), lambda i: (i, 0)),
        compiler_params=pltpu.CompilerParams(
            dimension_semantics=("parallel",),
            vmem_limit_bytes=vmem_limit_bytes),
        cost_estimate=cost,
    )(x2, w1p, b1p, w2p, b2p)

    return out2[:m, :c_out].reshape(*lead, c_out)


# --------------------------------------------------------------------------
# Pure-JAX reference (mirrors the PyTorch forward) for verification
# --------------------------------------------------------------------------
def reference_forward(x, w1, b1, w2, b2):
    hp = jax.lax.Precision.HIGHEST
    h = jnp.dot(x, w1, precision=hp) + b1
    h = _gelu_tanh(h)
    return jnp.dot(h, w2, precision=hp) + b2


# --------------------------------------------------------------------------
if __name__ == "__main__":
    in_features = 32
    hidden_features = 128          # mlp_ratio = 4
    out_features = 32
    batch = 2
    tokens = 64                    # e.g. an 8x8 window of tokens -> M = 128 rows

    key = jax.random.PRNGKey(0)
    kx, kw1, kb1, kw2, kb2 = jax.random.split(key, 5)

    x = jax.random.normal(kx, (batch, tokens, in_features), jnp.float32)
    w1 = jax.random.normal(kw1, (in_features, hidden_features), jnp.float32) * 0.05
    b1 = jax.random.normal(kb1, (hidden_features,), jnp.float32) * 0.05
    w2 = jax.random.normal(kw2, (hidden_features, out_features), jnp.float32) * 0.05
    b2 = jax.random.normal(kb2, (out_features,), jnp.float32) * 0.05

    ref = reference_forward(x, w1, b1, w2, b2)

    # 1) default path: lane-padded channels, 128 rows split into 2 parallel blocks.
    out = jax.block_until_ready(mlp_forward(x, w1, b1, w2, b2))
    np.testing.assert_allclose(np.asarray(out), np.asarray(ref),
                               rtol=1e-4, atol=1e-4)

    # 2) multi-step grid + row-padding path (128 rows -> 3 blocks of 48, 16 pad rows).
    out_tiled = jax.block_until_ready(
        mlp_forward(x, w1, b1, w2, b2, block_rows=48))
    np.testing.assert_allclose(np.asarray(out_tiled), np.asarray(ref),
                               rtol=1e-4, atol=1e-4)

    # 3) bf16 MXU fast path (v6e/v7x); f32 accumulation keeps error bounded.
    out_bf16 = jax.block_until_ready(
        mlp_forward(x, w1, b1, w2, b2, compute_dtype=jnp.bfloat16))
    np.testing.assert_allclose(np.asarray(out_bf16), np.asarray(ref),
                               rtol=5e-2, atol=5e-2)

    print("KERNEL_OK")
</pallas_src>

<mosaic_0001>
module attributes {stable_mosaic.version = 11 : i64} {
  func.func @_mlp_kernel(%arg0: i32, %arg1: memref<64x128xf32, #tpu.memory_space<vmem>>, %arg2: memref<128x128xf32, #tpu.memory_space<vmem>>, %arg3: memref<1x128xf32, #tpu.memory_space<vmem>>, %arg4: memref<128x128xf32, #tpu.memory_space<vmem>>, %arg5: memref<1x128xf32, #tpu.memory_space<vmem>>, %arg6: memref<64x128xf32, #tpu.memory_space<vmem>>) attributes {dimension_semantics = [#tpu.dimension_semantics<parallel>], iteration_bounds = array<i64: 2>, scalar_prefetch = 0 : i64, scratch_operands = 0 : i64, tpu.core_type = #tpu.core_type<tc>, window_params = [{transform_indices = @transform_0, window_bounds = array<i64: 64, 128>}, {pipeline_mode = #tpu.pipeline_mode<synchronous>, transform_indices = @transform_1, window_bounds = array<i64: 128, 128>}, {pipeline_mode = #tpu.pipeline_mode<synchronous>, transform_indices = @transform_2, window_bounds = array<i64: 1, 128>}, {pipeline_mode = #tpu.pipeline_mode<synchronous>, transform_indices = @transform_3, window_bounds = array<i64: 128, 128>}, {pipeline_mode = #tpu.pipeline_mode<synchronous>, transform_indices = @transform_4, window_bounds = array<i64: 1, 128>}, {transform_indices = @transform_5, window_bounds = array<i64: 64, 128>}]} {
    %c0 = arith.constant 0 : index
    %c0_0 = arith.constant 0 : index
    %0 = vector.load %arg1[%c0, %c0_0] : memref<64x128xf32, #tpu.memory_space<vmem>>, vector<64x128xf32>
    %c0_1 = arith.constant 0 : index
    %c0_2 = arith.constant 0 : index
    %1 = vector.load %arg2[%c0_1, %c0_2] : memref<128x128xf32, #tpu.memory_space<vmem>>, vector<128x128xf32>
    %cst = arith.constant dense<0.000000e+00> : vector<64x128xf32>
    %2 = tpu.matmul %0, %1, %cst {dimension_numbers = #tpu.dot_dimension_numbers<[1], [0], [0], [1], [0, 0, 1, 1], [], []>} : vector<64x128xf32>, vector<128x128xf32>, vector<64x128xf32> -> vector<64x128xf32>
    %c0_3 = arith.constant 0 : index
    %c0_4 = arith.constant 0 : index
    %3 = vector.load %arg3[%c0_3, %c0_4] : memref<1x128xf32, #tpu.memory_space<vmem>>, vector<1x128xf32>
    %4 = vector.broadcast %3 : vector<1x128xf32> to vector<64x128xf32>
    %5 = arith.addf %2, %4 : vector<64x128xf32>
    %cst_5 = arith.constant 5.000000e-01 : f32
    %6 = vector.broadcast %cst_5 : f32 to vector<64x128xf32>
    %7 = arith.mulf %6, %5 : vector<64x128xf32>
    %8 = arith.mulf %5, %5 : vector<64x128xf32>
    %9 = arith.mulf %8, %5 : vector<64x128xf32>
    %cst_6 = arith.constant 4.471500e-02 : f32
    %10 = vector.broadcast %cst_6 : f32 to vector<64x128xf32>
    %11 = arith.mulf %10, %9 : vector<64x128xf32>
    %12 = arith.addf %5, %11 : vector<64x128xf32>
    %cst_7 = arith.constant 0.797884583 : f32
    %13 = vector.broadcast %cst_7 : f32 to vector<64x128xf32>
    %14 = arith.mulf %13, %12 : vector<64x128xf32>
    %15 = math.tanh %14 : vector<64x128xf32>
    %cst_8 = arith.constant 1.000000e+00 : f32
    %16 = vector.broadcast %cst_8 : f32 to vector<64x128xf32>
    %17 = arith.addf %16, %15 : vector<64x128xf32>
    %18 = arith.mulf %7, %17 : vector<64x128xf32>
    %c0_9 = arith.constant 0 : index
    %c0_10 = arith.constant 0 : index
    %19 = vector.load %arg4[%c0_9, %c0_10] : memref<128x128xf32, #tpu.memory_space<vmem>>, vector<128x128xf32>
    %cst_11 = arith.constant dense<0.000000e+00> : vector<64x128xf32>
    %20 = tpu.matmul %18, %19, %cst_11 {dimension_numbers = #tpu.dot_dimension_numbers<[1], [0], [0], [1], [0, 0, 1, 1], [], []>} : vector<64x128xf32>, vector<128x128xf32>, vector<64x128xf32> -> vector<64x128xf32>
    %c0_12 = arith.constant 0 : index
    %c0_13 = arith.constant 0 : index
    %21 = vector.load %arg5[%c0_12, %c0_13] : memref<1x128xf32, #tpu.memory_space<vmem>>, vector<1x128xf32>
    %22 = vector.broadcast %21 : vector<1x128xf32> to vector<64x128xf32>
    %23 = arith.addf %20, %22 : vector<64x128xf32>
    %c0_14 = arith.constant 0 : index
    %c0_15 = arith.constant 0 : index
    %24 = vector.load %arg6[%c0_14, %c0_15] : memref<64x128xf32, #tpu.memory_space<vmem>>, vector<64x128xf32>
    tpu.vector_store %arg6[%c0_14, %c0_15], %23 {strides = array<i32>} : memref<64x128xf32, #tpu.memory_space<vmem>>, vector<64x128xf32>,
    return
  }
  func.func @transform_0(%arg0: i32) -> (i32, i32) {
    %c0_i32 = arith.constant 0 : i32
    %c0_i32_0 = arith.constant 0 : i32
    return %arg0, %c0_i32 : i32, i32
  }
  func.func @transform_1(%arg0: i32) -> (i32, i32) {
    %c0_i32 = arith.constant 0 : i32
    %c0_i32_0 = arith.constant 0 : i32
    %c0_i32_1 = arith.constant 0 : i32
    return %c0_i32, %c0_i32_0 : i32, i32
  }
  func.func @transform_2(%arg0: i32) -> (i32, i32) {
    %c0_i32 = arith.constant 0 : i32
    %c0_i32_0 = arith.constant 0 : i32
    %c0_i32_1 = arith.constant 0 : i32
    return %c0_i32, %c0_i32_0 : i32, i32
  }
  func.func @transform_3(%arg0: i32) -> (i32, i32) {
    %c0_i32 = arith.constant 0 : i32
    %c0_i32_0 = arith.constant 0 : i32
    %c0_i32_1 = arith.constant 0 : i32
    return %c0_i32, %c0_i32_0 : i32, i32
  }
  func.func @transform_4(%arg0: i32) -> (i32, i32) {
    %c0_i32 = arith.constant 0 : i32
    %c0_i32_0 = arith.constant 0 : i32
    %c0_i32_1 = arith.constant 0 : i32
    return %c0_i32, %c0_i32_0 : i32, i32
  }
  func.func @transform_5(%arg0: i32) -> (i32, i32) {
    %c0_i32 = arith.constant 0 : i32
    %c0_i32_0 = arith.constant 0 : i32
    return %arg0, %c0_i32 : i32, i32
  }
}

</mosaic_0001>

<llo_original>
// kernel: tpu_custom_call.1
$region0: #{tpu_custom_call.1}
  #allocation0 [shape = 'u32[]', space=smem, size = 0x4, offset = 0x4, fixed_abs, tag = 'smem constant byte address 0x4 - core index']
  #allocation1 [shape = 'u32[72,128]{1,0:T(1,128)}', space=vmem, size = 0x9000, scoped, tag = 'internal scratch']
  %s0 = inlined_call_operand.hbm [shape: f32[128,128], index: 0, kind: input, shape index: {}]
  %s1 = inlined_call_operand.hbm [shape: f32[128,128], index: 1, kind: input, shape index: {}]
  %s2 = inlined_call_operand.vmem [shape: f32[1,128], index: 2, kind: input, shape index: {}]
  %s3 = inlined_call_operand.hbm [shape: f32[128,128], index: 3, kind: input, shape index: {}]
  %s4 = inlined_call_operand.vmem [shape: f32[1,128], index: 4, kind: input, shape index: {}]
  %s5 = inlined_call_operand.hbm [shape: f32[128,128], index: 5, kind: output, shape index: {}]
  %s6 = sld [smem:[#allocation0]]
  $region65: #{tpu_custom_call.1} parent=0
    _
  %s8 = ssub.s32 1, %s6
  %s9 = scalar_select 0, %s8, %s6
  $region1: #{tpu_custom_call.1} parent=0
    #allocation2 [shape = 'u8[65536]{0}', space=vmem, size = 0x10000, scoped, tag = 'input window, operand 0']
    #allocation3 [shape = 's32[2]{0}', space=sflag, size = 0x8, scoped, tag = 'scoped memory for tpu_custom_call.1']
    #allocation4 [shape = 's32[2]{0}', space=sflag, size = 0x8, scoped, tag = 'scoped memory for tpu_custom_call.1']
    #allocation5 [shape = 'u8[65536]{0}', space=vmem, size = 0x10000, scoped, tag = 'input window, operand 1, single buffered']
    #allocation6 [shape = 's32[1]{0}', space=sflag, size = 0x4, scoped, tag = 'scoped memory for tpu_custom_call.1']
    #allocation7 [shape = 'u8[65536]{0}', space=vmem, size = 0x10000, scoped, tag = 'input window, operand 3, single buffered']
    #allocation8 [shape = 'u8[65536]{0}', space=vmem, size = 0x10000, scoped, tag = 'output window, operand 0']
    %10 = vsyncpa [#allocation3], 0
    %s11 = scalar_lea.sflag [#allocation3], 1
    %12 = vsyncpa %s11, 0
    %13 = vsyncpa [#allocation6], 0
    %14 = vsyncpa [#allocation4], 0
    %s15 = scalar_lea.sflag [#allocation4], 1
    %16 = vsyncpa %s15, 0
    loop: start=0, step=1, limit=4
    $region2: #{tpu_custom_call.1} parent=1 // loop_pre_header
      _
    $region3: #{tpu_custom_call.1} parent=1 // loop_header
      %s18 = sphi 0, %s22
      %p19 = scmp.ge.s32.totalorder %s18, 4
      %s28 = sphi 0, %s30
      %s31 = sphi 0, %s28
      %s32 = sphi 0, %s31
      %s48 = sphi 0, %s32
      %s52 = sphi 0, %s52
      %s54 = sphi 0, %s52
      %s55 = sphi 0, %s54
      %s69 = sphi 0, %s55
      %s73 = sphi 0, %s73
      %s75 = sphi 0, %s73
      %s76 = sphi 0, %s75
      %s90 = sphi 0, %s76
      %s94 = sphi 0, %s94
      %s96 = sphi 0, %s94
      %s97 = sphi 0, %s96
      %s111 = sphi 0, %s97
      %s115 = sphi 0, %s115
      %s117 = sphi 0, %s115
      %s118 = sphi 0, %s117
      %s132 = sphi 0, %s118
      %s138 = sphi 0, %s140
      %s141 = sphi 0, %s138
      %s142 = sphi 0, %s141
      %s158 = sphi 0, %s142
    $region4: #{tpu_custom_call.1} parent=1 // loop_header_branch
      %21 = sbr.rel (%p19) target = $region8
    $region5: #{tpu_custom_call.1} parent=1 // loop_body
      %s23 = ssub.s32 %s18, 1
      %s24 = ssub.s32 %s18, 2
      %s25 = sadd.s32 %s18, 1
      %s26 = ssub.s32 %s18, %s25
      %p27 = scmp.eq.s32.totalorder %s26, 0
      %s29 = sadd.s32 %s28, 1
      %s30 = scalar_select %p27, %s28, %s29
      %p33 = pneg %p27
      %p34 = scmp.eq.s32.totalorder %s18, 1
      %p35 = por %p33, %p34
      %p36 = scmp.ne.s32.totalorder %s28, %s31
      %p37 = scmp.eq.s32.totalorder %s18, 0
      %p38 = por %p36, %p37
      %p39 = scmp.ne.s32.totalorder %s28, %s31
      %p40 = scmp.eq.s32.totalorder %s23, 1
      %p41 = por %p39, %p40
      %p42 = scmp.ne.s32.totalorder %s31, %s32
      %p43 = scmp.eq.s32.totalorder %s23, 0
      %p44 = por %p42, %p43
      %p45 = scmp.ne.s32.totalorder %s31, %s32
      %p46 = scmp.eq.s32.totalorder %s24, 1
      %p47 = por %p45, %p46
      %p49 = scmp.ne.s32.totalorder %s32, %s48
      %p50 = scmp.eq.s32.totalorder %s24, 0
      %p51 = por %p49, %p50
      %s53 = sadd.s32 %s52, 1
      %p56 = scmp.eq.s32.totalorder %s18, 1
      %p57 = scmp.ne.s32.totalorder %s52, %s54
      %p58 = scmp.eq.s32.totalorder %s18, 0
      %p59 = por %p57, %p58
      %p60 = scmp.ne.s32.totalorder %s52, %s54
      %p61 = scmp.eq.s32.totalorder %s23, 1
      %p62 = por %p60, %p61
      %p63 = scmp.ne.s32.totalorder %s54, %s55
      %p64 = scmp.eq.s32.totalorder %s23, 0
      %p65 = por %p63, %p64
      %p66 = scmp.ne.s32.totalorder %s54, %s55
      %p67 = scmp.eq.s32.totalorder %s24, 1
      %p68 = por %p66, %p67
      %p70 = scmp.ne.s32.totalorder %s55, %s69
      %p71 = scmp.eq.s32.totalorder %s24, 0
      %p72 = por %p70, %p71
      %s74 = sadd.s32 %s73, 1
      %p77 = scmp.eq.s32.totalorder %s18, 1
      %p78 = scmp.ne.s32.totalorder %s73, %s75
      %p79 = scmp.eq.s32.totalorder %s18, 0
      %p80 = por %p78, %p79
      %p81 = scmp.ne.s32.totalorder %s73, %s75
      %p82 = scmp.eq.s32.totalorder %s23, 1
      %p83 = por %p81, %p82
      %p84 = scmp.ne.s32.totalorder %s75, %s76
      %p85 = scmp.eq.s32.totalorder %s23, 0
      %p86 = por %p84, %p85
      %p87 = scmp.ne.s32.totalorder %s75, %s76
      %p88 = scmp.eq.s32.totalorder %s24, 1
      %p89 = por %p87, %p88
      %p91 = scmp.ne.s32.totalorder %s76, %s90
      %p92 = scmp.eq.s32.totalorder %s24, 0
      %p93 = por %p91, %p92
      %s95 = sadd.s32 %s94, 1
      %p98 = scmp.eq.s32.totalorder %s18, 1
      %p99 = scmp.ne.s32.totalorder %s94, %s96
      %p100 = scmp.eq.s32.totalorder %s18, 0
      %p101 = por %p99, %p100
      %p102 = scmp.ne.s32.totalorder %s94, %s96
      %p103 = scmp.eq.s32.totalorder %s23, 1
      %p104 = por %p102, %p103
      %p105 = scmp.ne.s32.totalorder %s96, %s97
      %p106 = scmp.eq.s32.totalorder %s23, 0
      %p107 = por %p105, %p106
      %p108 = scmp.ne.s32.totalorder %s96, %s97
      %p109 = scmp.eq.s32.totalorder %s24, 1
      %p110 = por %p108, %p109
      %p112 = scmp.ne.s32.totalorder %s97, %s111
      %p113 = scmp.eq.s32.totalorder %s24, 0
      %p114 = por %p112, %p113
      %s116 = sadd.s32 %s115, 1
      %p119 = scmp.eq.s32.totalorder %s18, 1
      %p120 = scmp.ne.s32.totalorder %s115, %s117
      %p121 = scmp.eq.s32.totalorder %s18, 0
      %p122 = por %p120, %p121
      %p123 = scmp.ne.s32.totalorder %s115, %s117
      %p124 = scmp.eq.s32.totalorder %s23, 1
      %p125 = por %p123, %p124
      %p126 = scmp.ne.s32.totalorder %s117, %s118
      %p127 = scmp.eq.s32.totalorder %s23, 0
      %p128 = por %p126, %p127
      %p129 = scmp.ne.s32.totalorder %s117, %s118
      %p130 = scmp.eq.s32.totalorder %s24, 1
      %p131 = por %p129, %p130
      %p133 = scmp.ne.s32.totalorder %s118, %s132
      %p134 = scmp.eq.s32.totalorder %s24, 0
      %p135 = por %p133, %p134
      %s136 = ssub.s32 %s18, %s25
      %p137 = scmp.eq.s32.totalorder %s136, 0
      %s139 = sadd.s32 %s138, 1
      %s140 = scalar_select %p137, %s138, %s139
      %p143 = pneg %p137
      %p144 = scmp.eq.s32.totalorder %s18, 1
      %p145 = por %p143, %p144
      %p146 = scmp.ne.s32.totalorder %s138, %s141
      %p147 = scmp.eq.s32.totalorder %s18, 0
      %p148 = por %p146, %p147
      %p149 = scmp.ne.s32.totalorder %s138, %s141
      %p150 = scmp.eq.s32.totalorder %s23, 1
      %p151 = por %p149, %p150
      %p152 = scmp.ne.s32.totalorder %s141, %s142
      %p153 = scmp.eq.s32.totalorder %s23, 0
      %p154 = por %p152, %p153
      %p155 = scmp.ne.s32.totalorder %s141, %s142
      %p156 = scmp.eq.s32.totalorder %s24, 1
      %p157 = por %p155, %p156
      %p159 = scmp.ne.s32.totalorder %s142, %s158
      %p160 = scmp.eq.s32.totalorder %s24, 0
      %p161 = por %p159, %p160
      %p162 = scmp.le.s32.totalorder 1, %s18
      %p163 = scmp.lt.s32.totalorder %s18, 3
      %p164 = pnand %p162, %p163
      %p165 = pneg %p164
      // Predicated region
      $region9: #{tpu_custom_call.1} parent=5 // pred_check
        _
      $region10: #{tpu_custom_call.1} parent=5 // pred_check_branch
        %167 = sbr.rel (%p164) target = $region12
      $region11: #{tpu_custom_call.1} parent=5 // pred_region
        %s168 = ssub.s32 %s18, 1
        // Predicated region
        $region13: #{tpu_custom_call.1} parent=11 // pred_check
          %p169 = pneg %p65
        $region14: #{tpu_custom_call.1} parent=11 // pred_check_branch
          %171 = sbr.rel (%p169) target = $region16
        $region15: #{tpu_custom_call.1} parent=11 // pred_region
          %173 = vsyncadd [#allocation6], 0
          %s174 = sshll.u32 %s1, 4
          %s175 = int_to_ptr.hbm [resolvable:$true] %s174
          %s176 = sshll.u32 [#allocation5], 4
          %s177 = int_to_ptr.vmem [resolvable:$true] %s176
          %182 = dma.hbm_to_vmem [thread:$0]  %s175, 2048, %s177, [#allocation6], 128, 128, 8
        $region16: #{tpu_custom_call.1} parent=11 // pred_fallthru
          _
        // Predicated region
        $region17: #{tpu_custom_call.1} parent=11 // pred_check
          %p183 = pneg %p86
        $region18: #{tpu_custom_call.1} parent=11 // pred_check_branch
          %185 = sbr.rel (%p183) target = $region20
        $region19: #{tpu_custom_call.1} parent=11 // pred_region
          _
        $region20: #{tpu_custom_call.1} parent=11 // pred_fallthru
          _
        // Predicated region
        $region21: #{tpu_custom_call.1} parent=11 // pred_check
          %p186 = pneg %p107
        $region22: #{tpu_custom_call.1} parent=11 // pred_check_branch
          %188 = sbr.rel (%p186) target = $region24
        $region23: #{tpu_custom_call.1} parent=11 // pred_region
          %190 = vsyncadd [#allocation6], 0
          %s191 = sshll.u32 %s3, 4
          %s192 = int_to_ptr.hbm [resolvable:$true] %s191
          %s193 = sshll.u32 [#allocation7], 4
          %s194 = int_to_ptr.vmem [resolvable:$true] %s193
          %199 = dma.hbm_to_vmem [thread:$0]  %s192, 2048, %s194, [#allocation6], 128, 128, 8
        $region24: #{tpu_custom_call.1} parent=11 // pred_fallthru
          _
        // Predicated region
        $region25: #{tpu_custom_call.1} parent=11 // pred_check
          %p200 = pneg %p128
        $region26: #{tpu_custom_call.1} parent=11 // pred_check_branch
          %202 = sbr.rel (%p200) target = $region28
        $region27: #{tpu_custom_call.1} parent=11 // pred_region
          _
        $region28: #{tpu_custom_call.1} parent=11 // pred_fallthru
          _
      $region12: #{tpu_custom_call.1} parent=5 // pred_fallthru
        _
      %p203 = scmp.lt.s32.totalorder %s18, 2
      // Predicated region
      $region29: #{tpu_custom_call.1} parent=5 // pred_check
        %p204 = pneg %p203
      $region30: #{tpu_custom_call.1} parent=5 // pred_check_branch
        %206 = sbr.rel (%p204) target = $region32
      $region31: #{tpu_custom_call.1} parent=5 // pred_region
        // Predicated region
        $region33: #{tpu_custom_call.1} parent=31 // pred_check
          %p207 = pneg %p38
        $region34: #{tpu_custom_call.1} parent=31 // pred_check_branch
          %209 = sbr.rel (%p207) target = $region36
        $region35: #{tpu_custom_call.1} parent=31 // pred_region
          %s210 = sand.u32 %s28, 1
          %s211 = scalar_lea.sflag [#allocation3], %s210
          %s212 = sand.u32 %s28, 1
          %s213 = smul.addr %s212, 64
          %s214 = scalar_lea.vmem [#allocation2], %s213
          %s215 = smul.u32 8, %s18
          %217 = vsyncadd %s211, 0
          %s218 = smul.addr %s215, 8
          %s219 = scalar_lea.hbm %s0, %s218
          %s220 = sshll.u32 %s219, 4
          %s221 = int_to_ptr.hbm [resolvable:$true] %s220
          %s222 = sshll.u32 %s214, 4
          %s223 = int_to_ptr.vmem [resolvable:$true] %s222
          %228 = dma.hbm_to_vmem [thread:$0]  %s221, 1024, %s223, %s211, 128, 128, 8
        $region36: #{tpu_custom_call.1} parent=31 // pred_fallthru
          _
      $region32: #{tpu_custom_call.1} parent=5 // pred_fallthru
        _
      %p229 = scmp.le.s32.totalorder 1, %s18
      %p230 = scmp.lt.s32.totalorder %s18, 3
      %p231 = pnand %p229, %p230
      %p232 = pneg %p231
      // Predicated region
      $region37: #{tpu_custom_call.1} parent=5 // pred_check
        _
      $region38: #{tpu_custom_call.1} parent=5 // pred_check_branch
        %234 = sbr.rel (%p231) target = $region40
      $region39: #{tpu_custom_call.1} parent=5 // pred_region
        %s235 = ssub.s32 %s18, 1
        %s236 = sand.u32 %s31, 1
        %s237 = scalar_lea.sflag [#allocation3], %s236
        %s238 = sand.u32 %s31, 1
        %s239 = smul.addr %s238, 64
        %s240 = scalar_lea.vmem [#allocation2], %s239
        // Predicated region
        $region41: #{tpu_custom_call.1} parent=39 // pred_check
          %p241 = pneg %p44
        $region42: #{tpu_custom_call.1} parent=39 // pred_check_branch
          %243 = sbr.rel (%p241) target = $region44
        $region43: #{tpu_custom_call.1} parent=39 // pred_region
          %245 = dma.done %s237, 1024
        $region44: #{tpu_custom_call.1} parent=39 // pred_fallthru
          _
        // Predicated region
        $region45: #{tpu_custom_call.1} parent=39 // pred_check
          %p246 = pneg %p65
        $region46: #{tpu_custom_call.1} parent=39 // pred_check_branch
          %248 = sbr.rel (%p246) target = $region48
        $region47: #{tpu_custom_call.1} parent=39 // pred_region
          %250 = dma.done [#allocation6], 2048
        $region48: #{tpu_custom_call.1} parent=39 // pred_fallthru
          _
        // Predicated region
        $region49: #{tpu_custom_call.1} parent=39 // pred_check
          %p251 = pneg %p107
        $region50: #{tpu_custom_call.1} parent=39 // pred_check_branch
          %253 = sbr.rel (%p251) target = $region52
        $region51: #{tpu_custom_call.1} parent=39 // pred_region
          %255 = dma.done [#allocation6], 2048
        $region52: #{tpu_custom_call.1} parent=39 // pred_fallthru
          _
        %s256 = sand.u32 %s31, 1
        %s257 = scalar_lea.sflag [#allocation3], %s256
        %s258 = sand.u32 %s31, 1
        %s259 = smul.addr %s258, 64
        %s260 = scalar_lea.vmem [#allocation2], %s259
        %p261 = pneg %p44
        %p262 = pneg %p41
        %p263 = pneg %p65
        %p264 = pneg %p62
        %p265 = pneg %p86
        %p266 = pneg %p83
        %p267 = pneg %p107
        %p268 = pneg %p104
        %p269 = pneg %p128
        %p270 = pneg %p125
        %p271 = pneg %p154
        %p272 = pneg %p151
        %s273 = sand.u32 %s141, 1
        %s274 = scalar_lea.sflag [#allocation4], %s273
        %s275 = sand.u32 %s141, 1
        %s276 = smul.addr %s275, 64
        %s277 = scalar_lea.vmem [#allocation8], %s276
        %s278 = smul.u32 8, %s23
        %s279 = smul.u32 8, %s23
        %v280 = vld [vmem:[%s240] sm:$0xff]
        %v281 = vld [vmem:[%s240 + $0x8] sm:$0xff]
        %v282 = vld [vmem:[%s240 + $0x10] sm:$0xff]
        %v283 = vld [vmem:[%s240 + $0x18] sm:$0xff]
        %v284 = vld [vmem:[%s240 + $0x20] sm:$0xff]
        %v285 = vld [vmem:[%s240 + $0x28] sm:$0xff]
        %v286 = vld [vmem:[%s240 + $0x30] sm:$0xff]
        %v287 = vld [vmem:[%s240 + $0x38] sm:$0xff]
        %v288 = vld [vmem:[#allocation5] sm:$0xff]
        %v289 = vld [vmem:[#allocation5 + $0x8] sm:$0xff]
        %v290 = vld [vmem:[#allocation5 + $0x10] sm:$0xff]
        %v291 = vld [vmem:[#allocation5 + $0x18] sm:$0xff]
        %v292 = vld [vmem:[#allocation5 + $0x20] sm:$0xff]
        %v293 = vld [vmem:[#allocation5 + $0x28] sm:$0xff]
        %v294 = vld [vmem:[#allocation5 + $0x30] sm:$0xff]
        %v295 = vld [vmem:[#allocation5 + $0x38] sm:$0xff]
        %v296 = vld [vmem:[#allocation5 + $0x40] sm:$0xff]
        %v297 = vld [vmem:[#allocation5 + $0x48] sm:$0xff]
        %v298 = vld [vmem:[#allocation5 + $0x50] sm:$0xff]
        %v299 = vld [vmem:[#allocation5 + $0x58] sm:$0xff]
        %v300 = vld [vmem:[#allocation5 + $0x60] sm:$0xff]
        %v301 = vld [vmem:[#allocation5 + $0x68] sm:$0xff]
        %v302 = vld [vmem:[#allocation5 + $0x70] sm:$0xff]
        %v303 = vld [vmem:[#allocation5 + $0x78] sm:$0xff]
        %v304 = vld [vmem:[%s2] sm:$0x1]
        %v306 = vperm.slane %v304, 0
        %308 = vmatpush.msra.mxu0 %v303
        %309 = vmatpush.msra.mxu0 %v302
        %310 = vmatpush.msra.mxu0 %v301
        %311 = vmatpush.msra.mxu0 %v300
        %312 = vmatpush.msra.mxu0 %v299
        %313 = vmatpush.msra.mxu0 %v298
        %314 = vmatpush.msra.mxu0 %v297
        %315 = vmatpush.msra.mxu0 %v296
        %316 = vmatpush.msra.mxu0 %v295
        %317 = vmatpush.msra.mxu0 %v294
        %318 = vmatpush.msra.mxu0 %v293
        %319 = vmatpush.msra.mxu0 %v292
        %320 = vmatpush.msra.mxu0 %v291
        %321 = vmatpush.msra.mxu0 %v290
        %322 = vmatpush.msra.mxu0 %v289
        %323 = vmatpush.msra.mxu0 %v288
        %324 = vmatmul.f32.gmra.mxu0 %v280
        %v325 = vpop.f32.mrf.mxu0
        %v326 = vadd.f32 %v306, %v325
        %327 = vmatmul.f32.gmra.mxu0 %v281
        %v328 = vpop.f32.mrf.mxu0
        %v329 = vadd.f32 %v306, %v328
        %330 = vmatmul.f32.gmra.mxu0 %v282
        %v331 = vpop.f32.mrf.mxu0
        %v332 = vadd.f32 %v306, %v331
        %333 = vmatmul.f32.gmra.mxu0 %v283
        %v334 = vpop.f32.mrf.mxu0
        %v335 = vadd.f32 %v306, %v334
        %336 = vmatmul.f32.gmra.mxu0 %v284
        %v337 = vpop.f32.mrf.mxu0
        %v338 = vadd.f32 %v306, %v337
        %339 = vmatmul.f32.gmra.mxu0 %v285
        %v340 = vpop.f32.mrf.mxu0
        %v341 = vadd.f32 %v306, %v340
        %342 = vmatmul.f32.gmra.mxu0 %v286
        %v343 = vpop.f32.mrf.mxu0
        %v344 = vadd.f32 %v306, %v343
        %345 = vmatmul.f32.gmra.mxu0 %v287
        %v346 = vpop.f32.mrf.mxu0
        %v347 = vadd.f32 %v306, %v346
        %348 = vdwg.mxu0
        %v349 = vmul.f32 %v326, 0.5
        %v350 = vmul.f32 %v329, 0.5
        %v351 = vmul.f32 %v332, 0.5
        %v352 = vmul.f32 %v335, 0.5
        %v353 = vmul.f32 %v338, 0.5
        %v354 = vmul.f32 %v341, 0.5
        %v355 = vmul.f32 %v344, 0.5
        %v356 = vmul.f32 %v347, 0.5
        %v357 = vmul.f32 %v326, %v326
        %v358 = vmul.f32 %v329, %v329
        %v359 = vmul.f32 %v332, %v332
        %v360 = vmul.f32 %v335, %v335
        %v361 = vmul.f32 %v338, %v338
        %v362 = vmul.f32 %v341, %v341
        %v363 = vmul.f32 %v344, %v344
        %v364 = vmul.f32 %v347, %v347
        %v365 = vmul.f32 %v357, %v326
        %v366 = vmul.f32 %v358, %v329
        %v367 = vmul.f32 %v359, %v332
        %v368 = vmul.f32 %v360, %v335
        %v369 = vmul.f32 %v361, %v338
        %v370 = vmul.f32 %v362, %v341
        %v371 = vmul.f32 %v363, %v344
        %v372 = vmul.f32 %v364, %v347
        %v373 = vmul.f32 %v365, 0.044715
        %v374 = vmul.f32 %v366, 0.044715
        %v375 = vmul.f32 %v367, 0.044715
        %v376 = vmul.f32 %v368, 0.044715
        %v377 = vmul.f32 %v369, 0.044715
        %v378 = vmul.f32 %v370, 0.044715
        %v379 = vmul.f32 %v371, 0.044715
        %v380 = vmul.f32 %v372, 0.044715
        %v381 = vadd.f32 %v326, %v373
        %v382 = vadd.f32 %v329, %v374
        %v383 = vadd.f32 %v332, %v375
        %v384 = vadd.f32 %v335, %v376
        %v385 = vadd.f32 %v338, %v377
        %v386 = vadd.f32 %v341, %v378
        %v387 = vadd.f32 %v344, %v379
        %v388 = vadd.f32 %v347, %v380
        %v389 = vmul.f32 %v381, 0.7978846
        %v390 = vmul.f32 %v382, 0.7978846
        %v391 = vmul.f32 %v383, 0.7978846
        %v392 = vmul.f32 %v384, 0.7978846
        %v393 = vmul.f32 %v385, 0.7978846
        %v394 = vmul.f32 %v386, 0.7978846
        %v395 = vmul.f32 %v387, 0.7978846
        %v396 = vmul.f32 %v388, 0.7978846
        %v397 = vtanh.pop %v389
        %v398 = vtanh.pop %v390
        %v399 = vtanh.pop %v391
        %v400 = vtanh.pop %v392
        %v401 = vtanh.pop %v393
        %v402 = vtanh.pop %v394
        %v403 = vtanh.pop %v395
        %v404 = vtanh.pop %v396
        %v405 = vadd.f32 %v397, 1.0
        %v406 = vadd.f32 %v398, 1.0
        %v407 = vadd.f32 %v399, 1.0
        %v408 = vadd.f32 %v400, 1.0
        %v409 = vadd.f32 %v401, 1.0
        %v410 = vadd.f32 %v402, 1.0
        %v411 = vadd.f32 %v403, 1.0
        %v412 = vadd.f32 %v404, 1.0
        %v413 = vmul.f32 %v349, %v405
        %v414 = vmul.f32 %v350, %v406
        %v415 = vmul.f32 %v351, %v407
        %v416 = vmul.f32 %v352, %v408
        %v417 = vmul.f32 %v353, %v409
        %v418 = vmul.f32 %v354, %v410
        %v419 = vmul.f32 %v355, %v411
        %v420 = vmul.f32 %v356, %v412
        %v421 = vld [vmem:[#allocation7] sm:$0xff]
        %v422 = vld [vmem:[#allocation7 + $0x8] sm:$0xff]
        %v423 = vld [vmem:[#allocation7 + $0x10] sm:$0xff]
        %v424 = vld [vmem:[#allocation7 + $0x18] sm:$0xff]
        %v425 = vld [vmem:[#allocation7 + $0x20] sm:$0xff]
        %v426 = vld [vmem:[#allocation7 + $0x28] sm:$0xff]
        %v427 = vld [vmem:[#allocation7 + $0x30] sm:$0xff]
        %v428 = vld [vmem:[#allocation7 + $0x38] sm:$0xff]
        %v429 = vld [vmem:[#allocation7 + $0x40] sm:$0xff]
        %v430 = vld [vmem:[#allocation7 + $0x48] sm:$0xff]
        %v431 = vld [vmem:[#allocation7 + $0x50] sm:$0xff]
        %v432 = vld [vmem:[#allocation7 + $0x58] sm:$0xff]
        %v433 = vld [vmem:[#allocation7 + $0x60] sm:$0xff]
        %v434 = vld [vmem:[#allocation7 + $0x68] sm:$0xff]
        %v435 = vld [vmem:[#allocation7 + $0x70] sm:$0xff]
        %v436 = vld [vmem:[#allocation7 + $0x78] sm:$0xff]
        %v437 = vld [vmem:[%s4] sm:$0x1]
        %v439 = vperm.slane %v437, 0
        %441 = vmatpush.msra.mxu0 %v436
        %442 = vmatpush.msra.mxu0 %v435
        %443 = vmatpush.msra.mxu0 %v434
        %444 = vmatpush.msra.mxu0 %v433
        %445 = vmatpush.msra.mxu0 %v432
        %446 = vmatpush.msra.mxu0 %v431
        %447 = vmatpush.msra.mxu0 %v430
        %448 = vmatpush.msra.mxu0 %v429
        %449 = vmatpush.msra.mxu0 %v428
        %450 = vmatpush.msra.mxu0 %v427
        %451 = vmatpush.msra.mxu0 %v426
        %452 = vmatpush.msra.mxu0 %v425
        %453 = vmatpush.msra.mxu0 %v424
        %454 = vmatpush.msra.mxu0 %v423
        %455 = vmatpush.msra.mxu0 %v422
        %456 = vmatpush.msra.mxu0 %v421
        %457 = vmatmul.f32.gmra.mxu0 %v413
        %v458 = vpop.f32.mrf.mxu0
        %v459 = vadd.f32 %v439, %v458
        %460 = vmatmul.f32.gmra.mxu0 %v414
        %v461 = vpop.f32.mrf.mxu0
        %v462 = vadd.f32 %v439, %v461
        %463 = vmatmul.f32.gmra.mxu0 %v415
        %v464 = vpop.f32.mrf.mxu0
        %v465 = vadd.f32 %v439, %v464
        %466 = vmatmul.f32.gmra.mxu0 %v416
        %v467 = vpop.f32.mrf.mxu0
        %v468 = vadd.f32 %v439, %v467
        %469 = vmatmul.f32.gmra.mxu0 %v417
        %v470 = vpop.f32.mrf.mxu0
        %v471 = vadd.f32 %v439, %v470
        %472 = vmatmul.f32.gmra.mxu0 %v418
        %v473 = vpop.f32.mrf.mxu0
        %v474 = vadd.f32 %v439, %v473
        %475 = vmatmul.f32.gmra.mxu0 %v419
        %v476 = vpop.f32.mrf.mxu0
        %v477 = vadd.f32 %v439, %v476
        %478 = vmatmul.f32.gmra.mxu0 %v420
        %v479 = vpop.f32.mrf.mxu0
        %v480 = vadd.f32 %v439, %v479
        %481 = vdwg.mxu0
        %482 = vst [vmem:[%s277] sm:$0xff] %v459
        %483 = vst [vmem:[%s277 + $0x8] sm:$0xff] %v462
        %484 = vst [vmem:[%s277 + $0x10] sm:$0xff] %v465
        %485 = vst [vmem:[%s277 + $0x18] sm:$0xff] %v468
        %486 = vst [vmem:[%s277 + $0x20] sm:$0xff] %v471
        %487 = vst [vmem:[%s277 + $0x28] sm:$0xff] %v474
        %488 = vst [vmem:[%s277 + $0x30] sm:$0xff] %v477
        %489 = vst [vmem:[%s277 + $0x38] sm:$0xff] %v480
        %s490 = sand.u32 %s141, 1
        %s491 = scalar_lea.sflag [#allocation4], %s490
        %s492 = sand.u32 %s141, 1
        %s493 = smul.addr %s492, 64
        %s494 = scalar_lea.vmem [#allocation8], %s493
        // Predicated region
        $region53: #{tpu_custom_call.1} parent=39 // pred_check
          %p495 = pneg %p151
        $region54: #{tpu_custom_call.1} parent=39 // pred_check_branch
          %497 = sbr.rel (%p495) target = $region56
        $region55: #{tpu_custom_call.1} parent=39 // pred_region
          %s498 = smul.u32 8, %s23
          %500 = vsyncadd %s491, 0
          %s501 = smul.addr %s498, 8
          %s502 = scalar_lea.hbm %s5, %s501
          %s503 = sshll.u32 %s494, 4
          %s504 = int_to_ptr.vmem [resolvable:$true] %s503
          %s505 = sshll.u32 %s502, 4
          %s506 = int_to_ptr.hbm [resolvable:$true] %s505
          %511 = dma.vmem_to_hbm [thread:$0]  %s504, 1024, %s506, %s491, 128, 128, 8
        $region56: #{tpu_custom_call.1} parent=39 // pred_fallthru
          _
      $region40: #{tpu_custom_call.1} parent=5 // pred_fallthru
        _
      %p512 = scmp.le.s32.totalorder 2, %s18
      // Predicated region
      $region57: #{tpu_custom_call.1} parent=5 // pred_check
        %p513 = pneg %p512
      $region58: #{tpu_custom_call.1} parent=5 // pred_check_branch
        %515 = sbr.rel (%p513) target = $region60
      $region59: #{tpu_custom_call.1} parent=5 // pred_region
        %s516 = ssub.s32 %s18, 2
        // Predicated region
        $region61: #{tpu_custom_call.1} parent=59 // pred_check
          %p517 = pneg %p157
        $region62: #{tpu_custom_call.1} parent=59 // pred_check_branch
          %519 = sbr.rel (%p517) target = $region64
        $region63: #{tpu_custom_call.1} parent=59 // pred_region
          %s520 = sand.u32 %s142, 1
          %s521 = scalar_lea.sflag [#allocation4], %s520
          %s522 = sand.u32 %s142, 1
          %s523 = smul.addr %s522, 64
          %s524 = scalar_lea.vmem [#allocation8], %s523
          %526 = dma.done %s521, 1024
        $region64: #{tpu_custom_call.1} parent=59 // pred_fallthru
          _
      $region60: #{tpu_custom_call.1} parent=5 // pred_fallthru
        _
    $region6: #{tpu_custom_call.1} parent=1 // loop_footer
      %s22 = sadd.s32 1, %s18
    $region7: #{tpu_custom_call.1} parent=1 // loop_footer_branch
      %17 = sbr.rel target = $region3
    $region8: #{tpu_custom_call.1} parent=1 // loop_exit
      _
    %527 = vsyncpa [#allocation3], 1
    %s528 = scalar_lea.sflag [#allocation3], 1
    %529 = vsyncpa %s528, 1
    %530 = vsyncpa [#allocation6], 1
    %531 = vsyncpa [#allocation4], 1
    %s532 = scalar_lea.sflag [#allocation4], 1
    %533 = vsyncpa %s532, 1

</llo_original>
